<compile_context>
chip_gen: v7x
topology: tpu7x:2x2x1
jax: 0.10.0
libtpu: 0.0.40
codegen_flags: <defaults>
</compile_context>

<pallas_src>
import functools

import jax
import jax.numpy as jnp
from jax.experimental import pallas as pl
from jax.experimental.pallas import tpu as pltpu


def _ipow(v, p):
    """v**p via repeated VPU multiplies for small non-negative integer p."""
    if isinstance(p, int) or (isinstance(p, float) and float(p).is_integer()):
        n = int(p)
        if n == 0:
            return jnp.ones_like(v)
        r = v
        for _ in range(n - 1):
            r = r * v
        return r
    return jnp.power(v, p)  # fallback for non-integer exponents


def _mfdl_row_kernel(m_ref, y_pred_ref, y_true_ref, loss_ref, *,
                     p_pos, p_neg, clip_pos, clip_neg, pos_weight,
                     binary_targets):
    """Per-row marginal focal Dice loss for one batch tile.

    m_ref       : (1, 2) f32 in SMEM -> [margin for y!=1, margin for y==1]
    y_pred_ref  : (tile_b, C) logits (any float dtype)
    y_true_ref  : (tile_b, C) targets (0/1, any numeric dtype)
    loss_ref    : (1, tile_b) f32 per-row loss (clamped at 0), lane-dense
    """
    m0 = m_ref[0, 0]   # majority-class margin (y != 1)
    m1 = m_ref[0, 1]   # minority-class margin (y == 1)

    x = y_pred_ref[...].astype(jnp.float32)
    t = y_true_ref[...].astype(jnp.float32)

    batch_m = jnp.where(t == 1.0, m1, m0)
    predict = jax.nn.sigmoid(x - batch_m)
    one_m_t = 1.0 - t

    # positive branch
    xs_pos = predict
    p_pos_v = xs_pos
    if clip_pos is not None and clip_pos >= 0:
        p_pos_v = jnp.minimum(xs_pos + clip_pos, 1.0) * xs_pos
    # binary targets: t**k == t (saves VPU multiplies)
    t_pow = t if binary_targets else _ipow(t, p_pos)
    num_pos = jnp.sum(p_pos_v * t, axis=1, keepdims=True)
    den_pos = jnp.sum(_ipow(p_pos_v, p_pos) + t_pow, axis=1, keepdims=True)

    # negative branch
    xs_neg = 1.0 - predict
    p_neg_v = xs_neg
    if clip_neg is not None and clip_neg >= 0:
        p_neg_v = jnp.minimum(xs_neg + clip_neg, 1.0) * xs_neg
    omt_pow = one_m_t if binary_targets else _ipow(one_m_t, p_neg)
    num_neg = jnp.sum(p_neg_v * one_m_t, axis=1, keepdims=True)
    den_neg = jnp.sum(_ipow(p_neg_v, p_neg) + omt_pow, axis=1, keepdims=True)

    loss_pos = 1.0 - 2.0 * num_pos / den_pos
    loss_neg = 1.0 - 2.0 * num_neg / den_neg
    loss = loss_pos * pos_weight + loss_neg * (1.0 - pos_weight)
    loss = jnp.maximum(loss, 0.0)                   # (tile_b, 1)

    # Lane-dense writeback: relayout (tile_b, 1) -> (1, tile_b) (XLU, cheap).
    loss_ref[...] = loss.reshape(1, loss.shape[0])


# Rough number of live f32 (tile_b, C) intermediates the body materializes.
_F32_INTERMEDIATES = 6


def _pick_tiling(B, C, in_dtypes, working_set_bytes=16 * 1024 * 1024):
    """Pick (tile_b, num_tiles) so the per-step VMEM working set stays bounded.

    tile_b is a multiple of 128 when num_tiles > 1 (legal sublane granularity for
    f32/bf16/int8 inputs and lane-dense (1, tile_b) output blocks); padding of the
    batch dim (tile_b * num_tiles - B rows) is handled by the wrapper.
    """
    in_bytes = sum(jnp.dtype(dt).itemsize for dt in in_dtypes)
    # 2x for the double-buffered input pipeline + f32 intermediates in the body.
    bytes_per_row = max(1, C * (2 * in_bytes + 4 * _F32_INTERMEDIATES))
    rows_fit = max(1, working_set_bytes // bytes_per_row)
    aligned_fit = (rows_fit // 128) * 128
    if B <= 128 or aligned_fit < 128:
        # Small batch, or rows too wide for 128-row tiles: one full-extent block
        # (full-dim blocks are always legal).
        # TODO(synk): tile the class axis (reduction grid dim) for very large C.
        return B, 1
    num_tiles = max(2, pl.cdiv(B, aligned_fit))      # >= 2 steps feeds v7x's 2nd TC
    tile_b = pl.cdiv(pl.cdiv(B, num_tiles), 128) * 128
    num_tiles = pl.cdiv(B, tile_b)
    return tile_b, num_tiles


def marginal_focal_dice_loss(y_pred, y_true, *, max_m=0.2, p_pos=3, p_neg=2,
                             clip_pos=0.7, clip_neg=0.5, pos_weight=0.7,
                             class_weight='balanced', reduction='mean',
                             block_rows=None, assume_binary_targets=True,
                             working_set_bytes=16 * 1024 * 1024):
    """Pallas implementation of MarginalFocalDiceLoss.forward.

    assume_binary_targets=True (default) requires y_true entries in {0, 1} and
    enables the t**k == t simplification plus a single fused label count.
    """
    assert y_pred.shape == y_true.shape and y_pred.ndim == 2
    B, C = y_pred.shape
    N = B * C  # y_true.numel()

    # ---- global class statistics / margins (tiny pre-pass, plain JAX) ----
    if class_weight == 'balanced':
        if assume_binary_targets:
            n_one = jnp.sum(y_true.astype(jnp.float32))       # single fused pass
            n_zero = jnp.float32(N) - n_one
        else:
            n_zero = jnp.sum(y_true == 0).astype(jnp.float32)
            n_one = jnp.sum(y_true == 1).astype(jnp.float32)
        degenerate = jnp.logical_or(n_zero == 0, n_one == 0)
        maj_w = jnp.where(degenerate, jnp.float32(1.0), (N * 0.5) / n_zero)
        min_w = jnp.where(degenerate, jnp.float32(1.0), (N * 0.5) / n_one)
        total = maj_w + min_w
        maj_w = maj_w / total
        min_w = min_w / total
    else:
        n_one = None
        maj_w = jnp.float32(1.0)
        min_w = jnp.float32(1.0)

    m_list = jnp.stack([1.0 / jnp.sqrt(maj_w), 1.0 / jnp.sqrt(min_w)])
    m_list = (m_list * (max_m / jnp.max(m_list))).astype(jnp.float32)
    margins = m_list.reshape(1, 2)  # (1, 2) f32 -> SMEM

    # ---- tiling (VMEM-budgeted, 128-row granularity, >=2 steps when possible) ----
    if block_rows is None:
        tile_b, num_tiles = _pick_tiling(
            B, C, (y_pred.dtype, y_true.dtype), working_set_bytes)
    else:
        tile_b = int(block_rows)
        num_tiles = pl.cdiv(B, tile_b)
        if num_tiles > 1:
            assert tile_b % 128 == 0, (
                "block_rows must be a multiple of 128 when it does not cover "
                "the whole batch (sublane granularity + lane-dense output).")
    padded_B = tile_b * num_tiles

    y_pred_p, y_true_p = y_pred, y_true
    if padded_B != B:
        pad = padded_B - B
        # Zero-pad: pad rows produce finite garbage losses that are sliced off.
        y_pred_p = jnp.pad(y_pred, ((0, pad), (0, 0)))
        y_true_p = jnp.pad(y_true, ((0, pad), (0, 0)))

    kernel = functools.partial(
        _mfdl_row_kernel,
        p_pos=p_pos, p_neg=p_neg,
        clip_pos=clip_pos, clip_neg=clip_neg,
        pos_weight=float(pos_weight),
        binary_targets=bool(assume_binary_targets),
    )

    loss_rows = pl.pallas_call(
        kernel,
        out_shape=jax.ShapeDtypeStruct((1, padded_B), jnp.float32),
        grid_spec=pltpu.PrefetchScalarGridSpec(
            num_scalar_prefetch=0,
            grid=(num_tiles,),
            in_specs=[
                pl.BlockSpec(memory_space=pltpu.MemorySpace.SMEM),   # margins
                pl.BlockSpec((tile_b, C), lambda i: (i, 0)),         # y_pred
                pl.BlockSpec((tile_b, C), lambda i: (i, 0)),         # y_true
            ],
            out_specs=pl.BlockSpec((1, tile_b), lambda i: (0, i)),   # lane-dense
        ),
        compiler_params=pltpu.CompilerParams(
            dimension_semantics=("parallel",),
            vmem_limit_bytes=32 * 1024 * 1024,   # raise v5e default (16 MiB), <= v7x physical
        ),
    )(margins, y_pred_p, y_true_p)   # inputs kept in caller dtype (f32/bf16/int8/...)

    loss_rows = loss_rows[0, :B]     # (B,), drop pad rows

    # ---- final weighting / reduction (matches the PyTorch [N, B] broadcast) ----
    if reduction == 'none':
        w_elem = jnp.where(y_true.reshape(-1, 1) == 1, min_w, maj_w)
        return w_elem * loss_rows[None, :]

    sum_loss = jnp.sum(loss_rows)
    if class_weight == 'balanced':
        sum_w = n_one * min_w + (jnp.float32(N) - n_one) * maj_w
    else:
        sum_w = jnp.float32(N)        # all weights are 1
    if reduction == 'mean':
        return sum_w * sum_loss / (N * B)
    elif reduction == 'sum':
        return sum_w * sum_loss
    else:
        raise ValueError('Unexpected reduction {}'.format(reduction))


def marginal_focal_dice_loss_ref(y_pred, y_true, *, max_m=0.2, p_pos=3, p_neg=2,
                                 clip_pos=0.7, clip_neg=0.5, pos_weight=0.7,
                                 class_weight='balanced', reduction='mean'):
    """Pure-JAX reference mirroring the PyTorch forward (incl. the [N,B] broadcast)."""
    y_pred = y_pred.astype(jnp.float32)
    t = y_true.astype(jnp.float32)
    B = t.shape[0]
    N = t.size
    if class_weight == 'balanced':
        majority = jnp.sum(t == 0).astype(jnp.float32)
        minority = jnp.sum(t == 1).astype(jnp.float32)
        degenerate = jnp.logical_or(majority == 0, minority == 0)
        maj_w = jnp.where(degenerate, jnp.float32(1.0), (N / 2.0) / majority)
        min_w = jnp.where(degenerate, jnp.float32(1.0), (N / 2.0) / minority)
        total = maj_w + min_w
        maj_w, min_w = maj_w / total, min_w / total
    else:
        maj_w = jnp.float32(1.0)
        min_w = jnp.float32(1.0)
    m_list = jnp.stack([1.0 / jnp.sqrt(maj_w), 1.0 / jnp.sqrt(min_w)])
    m_list = m_list * (max_m / jnp.max(m_list))
    batch_m = jnp.where(t == 1, m_list[1], m_list[0])
    predict = jax.nn.sigmoid(y_pred - batch_m).reshape(B, -1)
    target = t.reshape(B, -1)
    xs_pos = predict
    p_pos_v = predict
    if clip_pos is not None and clip_pos >= 0:
        p_pos_v = jnp.minimum(xs_pos + clip_pos, 1.0) * xs_pos
    num_pos = jnp.sum(p_pos_v * target, axis=1)
    den_pos = jnp.sum(p_pos_v ** p_pos + target ** p_pos, axis=1)
    xs_neg = 1 - predict
    p_neg_v = 1 - predict
    if clip_neg is not None and clip_neg >= 0:
        p_neg_v = jnp.minimum(xs_neg + clip_neg, 1.0) * xs_neg
    num_neg = jnp.sum(p_neg_v * (1 - target), axis=1)
    den_neg = jnp.sum(p_neg_v ** p_neg + (1 - target) ** p_neg, axis=1)
    loss_pos = 1 - 2 * num_pos / den_pos
    loss_neg = 1 - 2 * num_neg / den_neg
    loss = loss_pos * pos_weight + loss_neg * (1 - pos_weight)
    loss = jnp.maximum(loss, 0.0)
    weighted = jnp.where(t.reshape(-1, 1) == 1, loss * min_w, loss * maj_w)  # [N, B]
    if reduction == 'mean':
        return jnp.mean(weighted)
    elif reduction == 'sum':
        return jnp.sum(weighted)
    return weighted


if __name__ == "__main__":
    key = jax.random.PRNGKey(0)
    kx, ky, kx2, ky2 = jax.random.split(key, 4)

    # Case 1: small multi-label setup (32 samples, 128 classes) -> single tile.
    B, C = 32, 128
    y_pred = jax.random.normal(kx, (B, C), dtype=jnp.float32) * 2.0
    y_true = (jax.random.uniform(ky, (B, C)) < 0.25).astype(jnp.float32)

    out = jax.block_until_ready(marginal_focal_dice_loss(y_pred, y_true, reduction='mean'))
    ref = marginal_focal_dice_loss_ref(y_pred, y_true, reduction='mean')
    assert jnp.allclose(out, ref, rtol=1e-4, atol=1e-6), (out, ref)

    out_sum = jax.block_until_ready(
        marginal_focal_dice_loss(y_pred, y_true, reduction='sum'))
    ref_sum = marginal_focal_dice_loss_ref(y_pred, y_true, reduction='sum')
    assert jnp.allclose(out_sum, ref_sum, rtol=1e-4, atol=1e-2), (out_sum, ref_sum)

    # Case 2: narrow dtypes (bf16 logits, int8 targets) -> halved HBM traffic path.
    out_bf16 = jax.block_until_ready(
        marginal_focal_dice_loss(y_pred.astype(jnp.bfloat16),
                                 y_true.astype(jnp.int8), reduction='mean'))
    ref_bf16 = marginal_focal_dice_loss_ref(y_pred.astype(jnp.bfloat16),
                                            y_true.astype(jnp.int8), reduction='mean')
    assert jnp.allclose(out_bf16, ref_bf16, rtol=1e-4, atol=1e-5), (out_bf16, ref_bf16)

    # Case 3: B > 128 and not a multiple of the tile -> multi-tile grid (>=2 steps),
    # padded batch, lane-dense (1, tile_b) output blocks.
    B2, C2 = 160, 64
    y_pred2 = jax.random.normal(kx2, (B2, C2), dtype=jnp.float32) * 2.0
    y_true2 = (jax.random.uniform(ky2, (B2, C2)) < 0.2).astype(jnp.float32)
    out2 = jax.block_until_ready(
        marginal_focal_dice_loss(y_pred2, y_true2, reduction='mean'))
    ref2 = marginal_focal_dice_loss_ref(y_pred2, y_true2, reduction='mean')
    assert jnp.allclose(out2, ref2, rtol=1e-4, atol=1e-6), (out2, ref2)

    print("KERNEL_OK")
</pallas_src>

<mosaic_0001>
module attributes {stable_mosaic.version = 11 : i64} {
  func.func @_mfdl_row_kernel(%arg0: i32, %arg1: memref<1x2xf32, #tpu.memory_space<smem>>, %arg2: memref<32x128xf32, #tpu.memory_space<vmem>>, %arg3: memref<32x128xf32, #tpu.memory_space<vmem>>, %arg4: memref<1x32xf32, #tpu.memory_space<vmem>>) attributes {dimension_semantics = [#tpu.dimension_semantics<parallel>], iteration_bounds = array<i64: 1>, scalar_prefetch = 0 : i64, scratch_operands = 0 : i64, tpu.core_type = #tpu.core_type<tc>, window_params = [{transform_indices = @transform_0, window_bounds = array<i64: 1, 2>}, {transform_indices = @transform_1, window_bounds = array<i64: 32, 128>}, {transform_indices = @transform_2, window_bounds = array<i64: 32, 128>}, {transform_indices = @transform_3, window_bounds = array<i64: 1, 32>}]} {
    %c0 = arith.constant 0 : index
    %c0_0 = arith.constant 0 : index
    %0 = memref.load %arg1[%c0, %c0_0] : memref<1x2xf32, #tpu.memory_space<smem>>
    %c0_1 = arith.constant 0 : index
    %c1 = arith.constant 1 : index
    %1 = memref.load %arg1[%c0_1, %c1] : memref<1x2xf32, #tpu.memory_space<smem>>
    %c0_2 = arith.constant 0 : index
    %c0_3 = arith.constant 0 : index
    %2 = vector.load %arg2[%c0_2, %c0_3] : memref<32x128xf32, #tpu.memory_space<vmem>>, vector<32x128xf32>
    %c0_4 = arith.constant 0 : index
    %c0_5 = arith.constant 0 : index
    %3 = vector.load %arg3[%c0_4, %c0_5] : memref<32x128xf32, #tpu.memory_space<vmem>>, vector<32x128xf32>
    %cst = arith.constant 1.000000e+00 : f32
    %4 = vector.broadcast %cst : f32 to vector<32x128xf32>
    %5 = arith.cmpf oeq, %3, %4 : vector<32x128xf32>
    %6 = vector.broadcast %1 : f32 to vector<32x128xf32>
    %7 = vector.broadcast %0 : f32 to vector<32x128xf32>
    %8 = arith.select %5, %6, %7 : vector<32x128xi1>, vector<32x128xf32>
    %9 = arith.subf %2, %8 : vector<32x128xf32>
    %10 = arith.negf %9 : vector<32x128xf32>
    %11 = math.exp %10 : vector<32x128xf32>
    %cst_6 = arith.constant 1.000000e+00 : f32
    %12 = vector.broadcast %cst_6 : f32 to vector<32x128xf32>
    %13 = arith.addf %12, %11 : vector<32x128xf32>
    %14 = arith.divf %12, %13 : vector<32x128xf32>
    %cst_7 = arith.constant 1.000000e+00 : f32
    %15 = vector.broadcast %cst_7 : f32 to vector<32x128xf32>
    %16 = arith.subf %15, %3 : vector<32x128xf32>
    %cst_8 = arith.constant 0.699999988 : f32
    %17 = vector.broadcast %cst_8 : f32 to vector<32x128xf32>
    %18 = arith.addf %14, %17 : vector<32x128xf32>
    %cst_9 = arith.constant 1.000000e+00 : f32
    %19 = vector.broadcast %cst_9 : f32 to vector<32x128xf32>
    %20 = arith.minimumf %18, %19 : vector<32x128xf32>
    %21 = arith.mulf %20, %14 : vector<32x128xf32>
    %22 = arith.mulf %21, %3 : vector<32x128xf32>
    %cst_10 = arith.constant dense<0.000000e+00> : vector<32xf32>
    %23 = vector.multi_reduction <add>, %22, %cst_10 [1] : vector<32x128xf32> to vector<32xf32>
    %24 = vector.shape_cast %23 : vector<32xf32> to vector<32x1xf32>
    %25 = arith.mulf %21, %21 : vector<32x128xf32>
    %26 = arith.mulf %25, %21 : vector<32x128xf32>
    %27 = arith.addf %26, %3 : vector<32x128xf32>
    %cst_11 = arith.constant dense<0.000000e+00> : vector<32xf32>
    %28 = vector.multi_reduction <add>, %27, %cst_11 [1] : vector<32x128xf32> to vector<32xf32>
    %29 = vector.shape_cast %28 : vector<32xf32> to vector<32x1xf32>
    %cst_12 = arith.constant 1.000000e+00 : f32
    %30 = vector.broadcast %cst_12 : f32 to vector<32x128xf32>
    %31 = arith.subf %30, %14 : vector<32x128xf32>
    %cst_13 = arith.constant 5.000000e-01 : f32
    %32 = vector.broadcast %cst_13 : f32 to vector<32x128xf32>
    %33 = arith.addf %31, %32 : vector<32x128xf32>
    %cst_14 = arith.constant 1.000000e+00 : f32
    %34 = vector.broadcast %cst_14 : f32 to vector<32x128xf32>
    %35 = arith.minimumf %33, %34 : vector<32x128xf32>
    %36 = arith.mulf %35, %31 : vector<32x128xf32>
    %37 = arith.mulf %36, %16 : vector<32x128xf32>
    %cst_15 = arith.constant dense<0.000000e+00> : vector<32xf32>
    %38 = vector.multi_reduction <add>, %37, %cst_15 [1] : vector<32x128xf32> to vector<32xf32>
    %39 = vector.shape_cast %38 : vector<32xf32> to vector<32x1xf32>
    %40 = arith.mulf %36, %36 : vector<32x128xf32>
    %41 = arith.addf %40, %16 : vector<32x128xf32>
    %cst_16 = arith.constant dense<0.000000e+00> : vector<32xf32>
    %42 = vector.multi_reduction <add>, %41, %cst_16 [1] : vector<32x128xf32> to vector<32xf32>
    %43 = vector.shape_cast %42 : vector<32xf32> to vector<32x1xf32>
    %cst_17 = arith.constant 2.000000e+00 : f32
    %44 = vector.broadcast %cst_17 : f32 to vector<32x1xf32>
    %45 = arith.mulf %44, %24 : vector<32x1xf32>
    %46 = arith.divf %45, %29 : vector<32x1xf32>
    %cst_18 = arith.constant 1.000000e+00 : f32
    %47 = vector.broadcast %cst_18 : f32 to vector<32x1xf32>
    %48 = arith.subf %47, %46 : vector<32x1xf32>
    %cst_19 = arith.constant 2.000000e+00 : f32
    %49 = vector.broadcast %cst_19 : f32 to vector<32x1xf32>
    %50 = arith.mulf %49, %39 : vector<32x1xf32>
    %51 = arith.divf %50, %43 : vector<32x1xf32>
    %cst_20 = arith.constant 1.000000e+00 : f32
    %52 = vector.broadcast %cst_20 : f32 to vector<32x1xf32>
    %53 = arith.subf %52, %51 : vector<32x1xf32>
    %cst_21 = arith.constant 0.699999988 : f32
    %54 = vector.broadcast %cst_21 : f32 to vector<32x1xf32>
    %55 = arith.mulf %48, %54 : vector<32x1xf32>
    %cst_22 = arith.constant 3.000000e-01 : f32
    %56 = vector.broadcast %cst_22 : f32 to vector<32x1xf32>
    %57 = arith.mulf %53, %56 : vector<32x1xf32>
    %58 = arith.addf %55, %57 : vector<32x1xf32>
    %cst_23 = arith.constant 0.000000e+00 : f32
    %59 = vector.broadcast %cst_23 : f32 to vector<32x1xf32>
    %60 = arith.maximumf %58, %59 : vector<32x1xf32>
    %61 = vector.shape_cast %60 : vector<32x1xf32> to vector<1x32xf32>
    %c0_24 = arith.constant 0 : index
    %c0_25 = arith.constant 0 : index
    %62 = vector.load %arg4[%c0_24, %c0_25] : memref<1x32xf32, #tpu.memory_space<vmem>>, vector<1x32xf32>
    tpu.vector_store %arg4[%c0_24, %c0_25], %61 {strides = array<i32>} : memref<1x32xf32, #tpu.memory_space<vmem>>, vector<1x32xf32>,
    return
  }
  func.func @transform_0(%arg0: i32) -> (i32, i32) {
    %c0_i32 = arith.constant 0 : i32
    %c0_i32_0 = arith.constant 0 : i32
    %c0_i32_1 = arith.constant 0 : i32
    return %c0_i32, %c0_i32_0 : i32, i32
  }
  func.func @transform_1(%arg0: i32) -> (i32, i32) {
    %c0_i32 = arith.constant 0 : i32
    %c0_i32_0 = arith.constant 0 : i32
    return %arg0, %c0_i32 : i32, i32
  }
  func.func @transform_2(%arg0: i32) -> (i32, i32) {
    %c0_i32 = arith.constant 0 : i32
    %c0_i32_0 = arith.constant 0 : i32
    return %arg0, %c0_i32 : i32, i32
  }
  func.func @transform_3(%arg0: i32) -> (i32, i32) {
    %c0_i32 = arith.constant 0 : i32
    %c0_i32_0 = arith.constant 0 : i32
    return %c0_i32, %arg0 : i32, i32
  }
}

</mosaic_0001>

<llo_original>
// kernel: tpu_custom_call.1
$region0: #{tpu_custom_call.1}
  #allocation0 [shape = 'u32[]', space=smem, size = 0x4, offset = 0x4, fixed_abs, tag = 'smem constant byte address 0x4 - core index']
  #allocation1 [shape = 'u32[144,128]{1,0:T(1,128)}', space=vmem, size = 0x12000, scoped, tag = 'internal scratch']
  %s0 = inlined_call_operand.hbm [shape: f32[1,2], index: 0, kind: input, shape index: {}]
  %s1 = inlined_call_operand.hbm [shape: f32[32,128], index: 1, kind: input, shape index: {}]
  %s2 = inlined_call_operand.hbm [shape: f32[32,128], index: 2, kind: input, shape index: {}]
  %s3 = inlined_call_operand.hbm [shape: f32[1,32], index: 3, kind: output, shape index: {}]
  %s4 = sld [smem:[#allocation0]]
  $region34: #{tpu_custom_call.1} parent=0
    _
  %s6 = ssub.s32 1, %s4
  %s7 = scalar_select 0, %s6, %s4
  $region1: #{tpu_custom_call.1} parent=0
    #allocation2 [shape = 'u8[512]{0}', space=smem, size = 0x200, scoped, tag = 'input window, operand 0, single buffered']
    #allocation3 [shape = 's32[1]{0}', space=sflag, size = 0x4, scoped, tag = 'scoped memory for tpu_custom_call.1']
    #allocation4 [shape = 's32[1]{0}', space=sflag, size = 0x4, scoped, tag = 'scoped memory for tpu_custom_call.1']
    #allocation5 [shape = 's32[1]{0}', space=sflag, size = 0x4, scoped, tag = 'scoped memory for tpu_custom_call.1']
    #allocation6 [shape = 'u8[16384]{0}', space=vmem, size = 0x4000, scoped, tag = 'input window, operand 1, single buffered']
    #allocation7 [shape = 'u8[16384]{0}', space=vmem, size = 0x4000, scoped, tag = 'input window, operand 2, single buffered']
    #allocation8 [shape = 's32[1]{0}', space=sflag, size = 0x4, scoped, tag = 'scoped memory for tpu_custom_call.1']
    #allocation9 [shape = 'u8[512]{0}', space=vmem, size = 0x400, scoped, tag = 'output window, operand 0, single buffered']
    %8 = vsyncpa [#allocation5], 0
    %9 = vsyncpa [#allocation3], 0
    %10 = vsyncpa [#allocation8], 0
    %11 = vsyncpa [#allocation4], 0
    // Predicated region
    $region2: #{tpu_custom_call.1} parent=1 // pred_check
      _
    $region3: #{tpu_custom_call.1} parent=1 // pred_check_branch
      %13 = sbr.rel (0) target = $region5
    $region4: #{tpu_custom_call.1} parent=1 // pred_region
      %s15 = ssub.s32 16, 16
      %16 = vsyncadd [#allocation5], %s15
      %19 = dma.hbm_to_smem %s0, 16, [#allocation2], [#allocation5]
    $region5: #{tpu_custom_call.1} parent=1 // pred_fallthru
      _
    // Predicated region
    $region6: #{tpu_custom_call.1} parent=1 // pred_check
      _
    $region7: #{tpu_custom_call.1} parent=1 // pred_check_branch
      %21 = sbr.rel (0) target = $region9
    $region8: #{tpu_custom_call.1} parent=1 // pred_region
      %s23 = ssub.s32 512, 512
      %24 = vsyncadd [#allocation3], %s23
      %s25 = sshll.u32 [#allocation6], 4
      %s26 = int_to_ptr.vmem [resolvable:$true] %s25
      %31 = dma.hbm_to_vmem [thread:$0]  %s1, 512, %s26, [#allocation3], 128, 128, 8
    $region9: #{tpu_custom_call.1} parent=1 // pred_fallthru
      _
    // Predicated region
    $region10: #{tpu_custom_call.1} parent=1 // pred_check
      _
    $region11: #{tpu_custom_call.1} parent=1 // pred_check_branch
      %33 = sbr.rel (0) target = $region13
    $region12: #{tpu_custom_call.1} parent=1 // pred_region
      %s35 = ssub.s32 512, 512
      %36 = vsyncadd [#allocation8], %s35
      %s37 = sshll.u32 [#allocation7], 4
      %s38 = int_to_ptr.vmem [resolvable:$true] %s37
      %43 = dma.hbm_to_vmem [thread:$0]  %s2, 512, %s38, [#allocation8], 128, 128, 8
    $region13: #{tpu_custom_call.1} parent=1 // pred_fallthru
      _
    // Predicated region
    $region14: #{tpu_custom_call.1} parent=1 // pred_check
      _
    $region15: #{tpu_custom_call.1} parent=1 // pred_check_branch
      %45 = sbr.rel (0) target = $region17
    $region16: #{tpu_custom_call.1} parent=1 // pred_region
      %46 = dma.done [#allocation5], 16
    $region17: #{tpu_custom_call.1} parent=1 // pred_fallthru
      _
    // Predicated region
    $region18: #{tpu_custom_call.1} parent=1 // pred_check
      _
    $region19: #{tpu_custom_call.1} parent=1 // pred_check_branch
      %48 = sbr.rel (0) target = $region21
    $region20: #{tpu_custom_call.1} parent=1 // pred_region
      %49 = dma.done [#allocation3], 512
    $region21: #{tpu_custom_call.1} parent=1 // pred_fallthru
      _
    // Predicated region
    $region22: #{tpu_custom_call.1} parent=1 // pred_check
      _
    $region23: #{tpu_custom_call.1} parent=1 // pred_check_branch
      %51 = sbr.rel (0) target = $region25
    $region24: #{tpu_custom_call.1} parent=1 // pred_region
      %52 = dma.done [#allocation8], 512
    $region25: #{tpu_custom_call.1} parent=1 // pred_fallthru
      _
    %53 = sfence
    %s54 = sld [smem:[#allocation2]]
    %s55 = sld [smem:[#allocation2 + $0x1]]
    %v56 = vld [vmem:[#allocation6] sm:$0xff]
    %v57 = vld [vmem:[#allocation6 + $0x8] sm:$0xff]
    %v58 = vld [vmem:[#allocation6 + $0x10] sm:$0xff]
    %v59 = vld [vmem:[#allocation6 + $0x18] sm:$0xff]
    %v60 = vld [vmem:[#allocation7] sm:$0xff]
    %v61 = vld [vmem:[#allocation7 + $0x8] sm:$0xff]
    %v62 = vld [vmem:[#allocation7 + $0x10] sm:$0xff]
    %v63 = vld [vmem:[#allocation7 + $0x18] sm:$0xff]
    %vm64 = vcmp.eq.f32.partialorder %v60, 1.0
    %vm65 = vcmp.eq.f32.partialorder %v61, 1.0
    %vm66 = vcmp.eq.f32.partialorder %v62, 1.0
    %vm67 = vcmp.eq.f32.partialorder %v63, 1.0
    %v68 = vstv %s55
    %v69 = vstv %s54
    %v70 = vsel %vm64, %v68, %v69
    %v71 = vsel %vm65, %v68, %v69
    %v72 = vsel %vm66, %v68, %v69
    %v73 = vsel %vm67, %v68, %v69
    %v74 = vsub.f32 %v56, %v70
    %v75 = vsub.f32 %v57, %v71
    %v76 = vsub.f32 %v58, %v72
    %v77 = vsub.f32 %v59, %v73
    %v78 = vxor.u32 %v74, 2147483648
    %v79 = vxor.u32 %v75, 2147483648
    %v80 = vxor.u32 %v76, 2147483648
    %v81 = vxor.u32 %v77, 2147483648
    %v82 = vmul.f32 %v78, 1.442695
    %v83 = vpow.pop %v82
    %v84 = vmul.f32 %v79, 1.442695
    %v85 = vpow.pop %v84
    %v86 = vmul.f32 %v80, 1.442695
    %v87 = vpow.pop %v86
    %v88 = vmul.f32 %v81, 1.442695
    %v89 = vpow.pop %v88
    %v90 = vadd.f32 %v83, 1.0
    %v91 = vadd.f32 %v85, 1.0
    %v92 = vadd.f32 %v87, 1.0
    %v93 = vadd.f32 %v89, 1.0
    %v94 = vrcp.pop %v90
    %v95 = vmul.f32 1.0, %v94
    %v96 = vrcp.pop %v91
    %v97 = vmul.f32 1.0, %v96
    %v98 = vrcp.pop %v92
    %v99 = vmul.f32 1.0, %v98
    %v100 = vrcp.pop %v93
    %v101 = vmul.f32 1.0, %v100
    %v102 = vsub.f32 1.0, %v60
    %v103 = vsub.f32 1.0, %v61
    %v104 = vsub.f32 1.0, %v62
    %v105 = vsub.f32 1.0, %v63
    %v106 = vadd.f32 %v95, 0.7
    %v107 = vadd.f32 %v97, 0.7
    %v108 = vadd.f32 %v99, 0.7
    %v109 = vadd.f32 %v101, 0.7
    %v110 = vmin.f32 %v106, 1.0
    %v111 = vmin.f32 %v107, 1.0
    %v112 = vmin.f32 %v108, 1.0
    %v113 = vmin.f32 %v109, 1.0
    %v114 = vmul.f32 %v110, %v95
    %v115 = vmul.f32 %v111, %v97
    %v116 = vmul.f32 %v112, %v99
    %v117 = vmul.f32 %v113, %v101
    %v118 = vmul.f32 %v114, %v60
    %v119 = vmul.f32 %v115, %v61
    %v120 = vmul.f32 %v116, %v62
    %v121 = vmul.f32 %v117, %v63
    %122 = vadd.xlane.f32.xlu0 %v118
    %v123 = vpop.xlane.xlu0 %122
    %124 = vadd.xlane.f32.xlu0 %v119
    %v125 = vpop.xlane.xlu0 %124
    %126 = vadd.xlane.f32.xlu0 %v120
    %v127 = vpop.xlane.xlu0 %126
    %128 = vadd.xlane.f32.xlu0 %v121
    %v129 = vpop.xlane.xlu0 %128
    %v130 = vmul.f32 %v114, %v114
    %v131 = vmul.f32 %v115, %v115
    %v132 = vmul.f32 %v116, %v116
    %v133 = vmul.f32 %v117, %v117
    %v134 = vmul.f32 %v130, %v114
    %v135 = vmul.f32 %v131, %v115
    %v136 = vmul.f32 %v132, %v116
    %v137 = vmul.f32 %v133, %v117
    %v138 = vadd.f32 %v134, %v60
    %v139 = vadd.f32 %v135, %v61
    %v140 = vadd.f32 %v136, %v62
    %v141 = vadd.f32 %v137, %v63
    %142 = vadd.xlane.f32.xlu0 %v138
    %v143 = vpop.xlane.xlu0 %142
    %144 = vadd.xlane.f32.xlu0 %v139
    %v145 = vpop.xlane.xlu0 %144
    %146 = vadd.xlane.f32.xlu0 %v140
    %v147 = vpop.xlane.xlu0 %146
    %148 = vadd.xlane.f32.xlu0 %v141
    %v149 = vpop.xlane.xlu0 %148
    %v150 = vsub.f32 1.0, %v95
    %v151 = vsub.f32 1.0, %v97
    %v152 = vsub.f32 1.0, %v99
    %v153 = vsub.f32 1.0, %v101
    %v154 = vadd.f32 %v150, 0.5
    %v155 = vadd.f32 %v151, 0.5
    %v156 = vadd.f32 %v152, 0.5
    %v157 = vadd.f32 %v153, 0.5
    %v158 = vmin.f32 %v154, 1.0
    %v159 = vmin.f32 %v155, 1.0
    %v160 = vmin.f32 %v156, 1.0
    %v161 = vmin.f32 %v157, 1.0
    %v162 = vmul.f32 %v158, %v150
    %v163 = vmul.f32 %v159, %v151
    %v164 = vmul.f32 %v160, %v152
    %v165 = vmul.f32 %v161, %v153
    %v166 = vmul.f32 %v162, %v102
    %v167 = vmul.f32 %v163, %v103
    %v168 = vmul.f32 %v164, %v104
    %v169 = vmul.f32 %v165, %v105
    %170 = vadd.xlane.f32.xlu0 %v166
    %v171 = vpop.xlane.xlu0 %170
    %172 = vadd.xlane.f32.xlu0 %v167
    %v173 = vpop.xlane.xlu0 %172
    %174 = vadd.xlane.f32.xlu0 %v168
    %v175 = vpop.xlane.xlu0 %174
    %176 = vadd.xlane.f32.xlu0 %v169
    %v177 = vpop.xlane.xlu0 %176
    %v178 = vmul.f32 %v162, %v162
    %v179 = vmul.f32 %v163, %v163
    %v180 = vmul.f32 %v164, %v164
    %v181 = vmul.f32 %v165, %v165
    %v182 = vadd.f32 %v178, %v102
    %v183 = vadd.f32 %v179, %v103
    %v184 = vadd.f32 %v180, %v104
    %v185 = vadd.f32 %v181, %v105
    %186 = vadd.xlane.f32.xlu0 %v182
    %v187 = vpop.xlane.xlu0 %186
    %188 = vadd.xlane.f32.xlu0 %v183
    %v189 = vpop.xlane.xlu0 %188
    %190 = vadd.xlane.f32.xlu0 %v184
    %v191 = vpop.xlane.xlu0 %190
    %192 = vadd.xlane.f32.xlu0 %v185
    %v193 = vpop.xlane.xlu0 %192
    %v194 = vmul.f32 %v123, 2.0
    %v195 = vmul.f32 %v125, 2.0
    %v196 = vmul.f32 %v127, 2.0
    %v197 = vmul.f32 %v129, 2.0
    %v198 = vrcp.pop %v143
    %v199 = vmul.f32 %v194, %v198
    %v200 = vrcp.pop %v145
    %v201 = vmul.f32 %v195, %v200
    %v202 = vrcp.pop %v147
    %v203 = vmul.f32 %v196, %v202
    %v204 = vrcp.pop %v149
    %v205 = vmul.f32 %v197, %v204
    %v206 = vsub.f32 1.0, %v199
    %v207 = vsub.f32 1.0, %v201
    %v208 = vsub.f32 1.0, %v203
    %v209 = vsub.f32 1.0, %v205
    %v210 = vmul.f32 %v171, 2.0
    %v211 = vmul.f32 %v173, 2.0
    %v212 = vmul.f32 %v175, 2.0
    %v213 = vmul.f32 %v177, 2.0
    %v214 = vrcp.pop %v187
    %v215 = vmul.f32 %v210, %v214
    %v216 = vrcp.pop %v189
    %v217 = vmul.f32 %v211, %v216
    %v218 = vrcp.pop %v191
    %v219 = vmul.f32 %v212, %v218
    %v220 = vrcp.pop %v193
    %v221 = vmul.f32 %v213, %v220
    %v222 = vsub.f32 1.0, %v215
    %v223 = vsub.f32 1.0, %v217
    %v224 = vsub.f32 1.0, %v219
    %v225 = vsub.f32 1.0, %v221
    %v226 = vmul.f32 %v206, 0.7
    %v227 = vmul.f32 %v207, 0.7
    %v228 = vmul.f32 %v208, 0.7
    %v229 = vmul.f32 %v209, 0.7
    %v230 = vmul.f32 %v222, 0.3
    %v231 = vmul.f32 %v223, 0.3
    %v232 = vmul.f32 %v224, 0.3
    %v233 = vmul.f32 %v225, 0.3
    %v234 = vadd.f32 %v226, %v230
    %v235 = vadd.f32 %v227, %v231
    %v236 = vadd.f32 %v228, %v232
    %v237 = vadd.f32 %v229, %v233
    %v238 = vmax.f32 %v234, 0.0
    %v239 = vmax.f32 %v235, 0.0
    %v240 = vmax.f32 %v236, 0.0
    %v241 = vmax.f32 %v237, 0.0
    %v246 = vlaneseq
    %v247 = vand.u32 %v246, 127
    %v248 = vlaneseq
    %v249 = vshrl.u32 %v248, 7
    %v250 = vsub.s32 %v247, %v249
    %v251 = vrot.slane %v238, %v250
    %v252 = vadd.s32 %v247, 4294967288
    %v253 = vlaneseq
    %v254 = vshrl.u32 %v253, 7
    %v255 = vsub.s32 %v252, %v254
    %v256 = vrot.slane %v239, %v255
    %vm257 = vcmask 130112
    %v258 = vsel %vm257, %v256, %v251
    %v259 = vadd.s32 %v247, 4294967280
    %v260 = vlaneseq
    %v261 = vshrl.u32 %v260, 7
    %v262 = vsub.s32 %v259, %v261
    %v263 = vrot.slane %v240, %v262
    %vm264 = vcmask 195712
    %v265 = vsel %vm264, %v263, %v258
    %v266 = vadd.s32 %v247, 4294967272
    %v267 = vlaneseq
    %v268 = vshrl.u32 %v267, 7
    %v269 = vsub.s32 %v266, %v268
    %v270 = vrot.slane %v241, %v269
    %vm271 = vcmask 261312
    %v272 = vsel %vm271, %v270, %v265
    %vm274 = vcmask 253952
    %275 = vst.msk [vmem:[#allocation9] sm:$0x1] %vm274, %v272
    // Predicated region
    $region26: #{tpu_custom_call.1} parent=1 // pred_check
      _
    $region27: #{tpu_custom_call.1} parent=1 // pred_check_branch
      %277 = sbr.rel (0) target = $region29
    $region28: #{tpu_custom_call.1} parent=1 // pred_region
      %s279 = ssub.s32 16, 16
      %280 = vsyncadd [#allocation4], %s279
      %s282 = sshll.u32 [#allocation9], 4
      %s283 = int_to_ptr.vmem [resolvable:$true] %s282
      %285 = dma.vmem_to_hbm [thread:$0]  %s283, 16, %s3, [#allocation4]
    $region29: #{tpu_custom_call.1} parent=1 // pred_fallthru
      _
    // Predicated region
    $region30: #{tpu_custom_call.1} parent=1 // pred_check
      _
    $region31: #{tpu_custom_call.1} parent=1 // pred_check_branch
      %287 = sbr.rel (0) target = $region33
    $region32: #{tpu_custom_call.1} parent=1 // pred_region
      %288 = dma.done [#allocation4], 16
    $region33: #{tpu_custom_call.1} parent=1 // pred_fallthru
      _
    %289 = vsyncpa [#allocation3], 1
    %290 = vsyncpa [#allocation8], 1
    %291 = vsyncpa [#allocation4], 1
    %292 = vsyncpa [#allocation5], 1

</llo_original>
